<compile_context>
chip_gen: v6e
topology: v6e:2x2x1
jax: 0.10.0
libtpu: 0.0.40
codegen_flags: <defaults>
</compile_context>

<pallas_src>
import jax
import jax.numpy as jnp
from jax.experimental import pallas as pl
from jax.experimental.pallas import tpu as pltpu


def _round_up(x, m):
    return ((x + m - 1) // m) * m


def _sublane(dtype):
    # Packed sublane multiple: 8 for 4-byte, 16 for 2-byte, 32 for 1-byte.
    return max(8, 32 // jnp.dtype(dtype).itemsize)


def _pad_cast(x, target_shape, dtype):
    """Zero-pad up to target_shape and cast; no-op when already matching."""
    if tuple(x.shape) != tuple(target_shape):
        pads = [(0, t - s) for s, t in zip(x.shape, target_shape)]
        x = jnp.pad(x, pads)
    if x.dtype != jnp.dtype(dtype):
        x = x.astype(dtype)
    return x


def _gnn_fused_kernel(e_ref, m_ref, w1_ref, b1_ref, w2_ref, b2_ref, o_ref):
    # neighbor_agg = E_tile @ M            (MXU, f32 accumulation)
    agg = jnp.dot(e_ref[...], m_ref[...], preferred_element_type=jnp.float32)
    # fc1 + ReLU + fc2 fused epilogue (biases stay f32).
    h = jnp.dot(agg.astype(w1_ref.dtype), w1_ref[...],
                preferred_element_type=jnp.float32) + b1_ref[...]
    h = jnp.maximum(h, 0.0)
    y = jnp.dot(h.astype(w2_ref.dtype), w2_ref[...],
                preferred_element_type=jnp.float32) + b2_ref[...]
    o_ref[...] = y.astype(o_ref.dtype)


def _gnn_ktiled_kernel(e_ref, m_ref, w1_ref, b1_ref, w2_ref, b2_ref, o_ref,
                       acc_ref):
    k = pl.program_id(2)
    part = jnp.dot(e_ref[...], m_ref[...], preferred_element_type=jnp.float32)

    # Initialize the accumulator with the first partial product (saves the
    # zero-fill store and one read+add on the first K step).
    @pl.when(k == 0)
    def _():
        acc_ref[...] = part

    @pl.when(k > 0)
    def _():
        acc_ref[...] += part

    # fc1 + ReLU + fc2 epilogue + store only on the last K step.
    @pl.when(k == pl.num_programs(2) - 1)
    def _():
        agg = acc_ref[...]
        h = jnp.dot(agg.astype(w1_ref.dtype), w1_ref[...],
                    preferred_element_type=jnp.float32) + b1_ref[...]
        h = jnp.maximum(h, 0.0)
        y = jnp.dot(h.astype(w2_ref.dtype), w2_ref[...],
                    preferred_element_type=jnp.float32) + b2_ref[...]
        o_ref[...] = y.astype(o_ref.dtype)


def graph_gnn_forward(M, E, W1, b1, W2, b2, *, compute_dtype=jnp.bfloat16,
                      row_tile=512, k_tile=2048, fused_n_limit=4096):
    """Pallas GraphGNN forward.

    M: [N, D] or [G, N, D];  E: [N, N] or [G, N, N]
    W1: [D, H], b1: [1, H], W2: [H, D], b2: [1, D]   (x @ W layout)
    Returns [N, D] / [G, N, D] in M's dtype.
    """
    batched = (M.ndim == 3)
    M3 = M if batched else M[None]
    E3 = E if batched else E[None]
    G, N, D = M3.shape
    H = W1.shape[1]
    assert E3.shape == (G, N, N)
    assert W1.shape == (D, H) and b1.shape == (1, H)
    assert W2.shape == (H, D) and b2.shape == (1, D)

    out_dtype = M.dtype
    cdt = jnp.dtype(compute_dtype)
    it_c = cdt.itemsize
    it_o = jnp.dtype(out_dtype).itemsize

    # Lane-dense feature dims (multiples of 128).
    Dp = _round_up(D, 128)
    Hp = _round_up(H, 128)

    # Row tiling: round to the packed sublane multiple of the compute dtype
    # (16 for bf16, 8 for f32) so E loads / output stores stay unmasked.
    sub = max(_sublane(cdt), _sublane(out_dtype))
    assert row_tile % sub == 0 and k_tile % 128 == 0
    n_rows = _round_up(N, sub)
    TM = n_rows if n_rows <= row_tile else row_tile
    Nr = _round_up(N, TM)

    # Fused (no K axis) path whenever the contraction dim and the resident M
    # block are moderate.
    Nk_f = _round_up(N, 128)
    fused = (Nk_f <= fused_n_limit) and (Nk_f * Dp * it_c <= (8 << 20))

    w_bytes = (Dp * Hp + Hp * Dp) * it_c + (Hp + Dp) * 4

    if fused:
        Nk = Nk_f
        grid = (G, Nr // TM)
        in_specs = [
            pl.BlockSpec((None, TM, Nk), lambda g, i: (g, i, 0)),   # E tile
            pl.BlockSpec((None, Nk, Dp), lambda g, i: (g, 0, 0)),   # M (resident)
            pl.BlockSpec((Dp, Hp), lambda g, i: (0, 0)),            # W1 (resident)
            pl.BlockSpec((1, Hp), lambda g, i: (0, 0)),             # b1
            pl.BlockSpec((Hp, Dp), lambda g, i: (0, 0)),            # W2
            pl.BlockSpec((1, Dp), lambda g, i: (0, 0)),             # b2
        ]
        out_specs = pl.BlockSpec((None, TM, Dp), lambda g, i: (g, i, 0))
        scratch_shapes = []
        kernel = _gnn_fused_kernel
        dim_sem = ("parallel", "parallel")
        vmem_need = (2 * (TM * Nk * it_c + Nk * Dp * it_c + TM * Dp * it_o)
                     + 2 * w_bytes)
    else:
        TK = min(k_tile, Nk_f)
        Nk = _round_up(N, TK)
        grid = (G, Nr // TM, Nk // TK)
        in_specs = [
            pl.BlockSpec((None, TM, TK), lambda g, i, k: (g, i, k)),  # E tile
            pl.BlockSpec((None, TK, Dp), lambda g, i, k: (g, k, 0)),  # M tile
            pl.BlockSpec((Dp, Hp), lambda g, i, k: (0, 0)),
            pl.BlockSpec((1, Hp), lambda g, i, k: (0, 0)),
            pl.BlockSpec((Hp, Dp), lambda g, i, k: (0, 0)),
            pl.BlockSpec((1, Dp), lambda g, i, k: (0, 0)),
        ]
        out_specs = pl.BlockSpec((None, TM, Dp), lambda g, i, k: (g, i, 0))
        scratch_shapes = [pltpu.VMEM((TM, Dp), jnp.float32)]
        kernel = _gnn_ktiled_kernel
        dim_sem = ("parallel", "parallel", "arbitrary")
        vmem_need = (2 * (TM * TK * it_c + TK * Dp * it_c + TM * Dp * it_o)
                     + 2 * w_bytes + TM * Dp * 4)

    # Only touch E / M when padding or a dtype cast is actually required — a
    # caller that stores E in bf16 at aligned sizes pays nothing here.
    E_p = _pad_cast(E3, (G, Nr, Nk), cdt)
    M_p = _pad_cast(M3, (G, Nk, Dp), cdt)
    W1_p = _pad_cast(W1, (Dp, Hp), cdt)
    W2_p = _pad_cast(W2, (Hp, Dp), cdt)
    b1_p = _pad_cast(b1, (1, Hp), jnp.float32)   # biases stay f32 (f32 acc)
    b2_p = _pad_cast(b2, (1, Dp), jnp.float32)

    cost = pl.CostEstimate(
        flops=2 * G * (Nr * Nk * Dp + Nr * Dp * Hp + Nr * Hp * Dp),
        transcendentals=0,
        bytes_accessed=(it_c * (G * (Nr * Nk + Nk * Dp) + Dp * Hp + Hp * Dp)
                        + 4 * (Hp + Dp) + it_o * G * Nr * Dp),
    )

    # Request roughly the actual footprint + headroom, never all of v7x's
    # 64 MiB per TensorCore.
    vmem_limit = int(min(48 << 20, max(vmem_need + (4 << 20), 16 << 20)))

    out_p = pl.pallas_call(
        kernel,
        out_shape=jax.ShapeDtypeStruct((G, Nr, Dp), out_dtype),
        grid_spec=pltpu.PrefetchScalarGridSpec(
            num_scalar_prefetch=0,
            grid=grid,
            in_specs=in_specs,
            out_specs=out_specs,
            scratch_shapes=scratch_shapes,
        ),
        compiler_params=pltpu.CompilerParams(
            dimension_semantics=dim_sem,
            vmem_limit_bytes=vmem_limit,
        ),
        cost_estimate=cost,
    )(E_p, M_p, W1_p, b1_p, W2_p, b2_p)

    out = out_p[:, :N, :D]
    return out if batched else out[0]


def init_params(key, input_dim, hidden_dim):
    """Deterministic init mimicking nn.Linear's uniform(-1/sqrt(fan_in), +)."""
    k1, k2, k3, k4 = jax.random.split(key, 4)
    bound1 = 1.0 / jnp.sqrt(input_dim)
    bound2 = 1.0 / jnp.sqrt(hidden_dim)
    W1 = jax.random.uniform(k1, (input_dim, hidden_dim), jnp.float32,
                            -bound1, bound1)
    b1 = jax.random.uniform(k2, (1, hidden_dim), jnp.float32, -bound1, bound1)
    W2 = jax.random.uniform(k3, (hidden_dim, input_dim), jnp.float32,
                            -bound2, bound2)
    b2 = jax.random.uniform(k4, (1, input_dim), jnp.float32, -bound2, bound2)
    return W1, b1, W2, b2


def _rel_err(a, b):
    return float(jnp.max(jnp.abs(a - b)) / (jnp.max(jnp.abs(b)) + 1e-6))


if __name__ == "__main__":
    key = jax.random.PRNGKey(0)
    ks = jax.random.split(key, 9)

    # ----- 1) toy single graph from the original module (fused path) -----
    N, D, H = 8, 16, 32
    M = jax.random.normal(ks[0], (N, D), jnp.float32)
    E = jax.random.normal(ks[1], (N, N), jnp.float32)
    W1, b1, W2, b2 = init_params(ks[2], D, H)
    ref = jnp.maximum((E @ M) @ W1 + b1, 0.0) @ W2 + b2

    # exact-plumbing check in f32
    out_f32 = jax.block_until_ready(
        graph_gnn_forward(M, E, W1, b1, W2, b2, compute_dtype=jnp.float32))
    assert out_f32.shape == (N, D)
    assert jnp.allclose(out_f32, ref, atol=1e-4, rtol=1e-4)

    # default bf16 compute path
    out_bf = jax.block_until_ready(graph_gnn_forward(M, E, W1, b1, W2, b2))
    assert out_bf.shape == (N, D)
    assert _rel_err(out_bf, ref) < 5e-2

    # ----- 2) batched graphs, caller stores E in bf16 (fused path) -----
    G, N2, D2, H2 = 3, 64, 48, 96
    M2 = jax.random.normal(ks[3], (G, N2, D2), jnp.float32)
    E2 = jax.random.normal(ks[4], (G, N2, N2), jnp.float32).astype(jnp.bfloat16)
    W1_2, b1_2, W2_2, b2_2 = init_params(ks[5], D2, H2)
    out2 = jax.block_until_ready(
        graph_gnn_forward(M2, E2, W1_2, b1_2, W2_2, b2_2))
    agg2 = jnp.einsum('gnm,gmd->gnd', E2.astype(jnp.float32), M2)
    ref2 = jnp.maximum(agg2 @ W1_2 + b1_2, 0.0) @ W2_2 + b2_2
    assert out2.shape == (G, N2, D2)
    assert _rel_err(out2, ref2) < 5e-2

    # ----- 3) larger single graph forced through the K-tiled fallback -----
    N3, D3, H3 = 384, 48, 96
    M3 = jax.random.normal(ks[6], (N3, D3), jnp.float32)
    E3 = jax.random.normal(ks[7], (N3, N3), jnp.float32)
    W1_3, b1_3, W2_3, b2_3 = init_params(ks[8], D3, H3)
    out3 = jax.block_until_ready(
        graph_gnn_forward(M3, E3, W1_3, b1_3, W2_3, b2_3,
                          row_tile=256, k_tile=128, fused_n_limit=128))
    ref3 = jnp.maximum((E3 @ M3) @ W1_3 + b1_3, 0.0) @ W2_3 + b2_3
    assert out3.shape == (N3, D3)
    assert _rel_err(out3, ref3) < 5e-2

    print("KERNEL_OK")
</pallas_src>

<mosaic_0001>
module attributes {stable_mosaic.version = 11 : i64} {
  func.func @_gnn_fused_kernel(%arg0: i32, %arg1: i32, %arg2: memref<1x8x128xf32, #tpu.memory_space<vmem>>, %arg3: memref<1x128x128xf32, #tpu.memory_space<vmem>>, %arg4: memref<128x128xf32, #tpu.memory_space<vmem>>, %arg5: memref<1x128xf32, #tpu.memory_space<vmem>>, %arg6: memref<128x128xf32, #tpu.memory_space<vmem>>, %arg7: memref<1x128xf32, #tpu.memory_space<vmem>>, %arg8: memref<1x8x128xf32, #tpu.memory_space<vmem>>) attributes {dimension_semantics = [#tpu.dimension_semantics<parallel>, #tpu.dimension_semantics<parallel>], iteration_bounds = array<i64: 1, 1>, scalar_prefetch = 0 : i64, scratch_operands = 0 : i64, tpu.core_type = #tpu.core_type<tc>, window_params = [{transform_indices = @transform_0, window_bounds = array<i64: 1, 8, 128>}, {transform_indices = @transform_1, window_bounds = array<i64: 1, 128, 128>}, {pipeline_mode = #tpu.pipeline_mode<synchronous>, transform_indices = @transform_2, window_bounds = array<i64: 128, 128>}, {pipeline_mode = #tpu.pipeline_mode<synchronous>, transform_indices = @transform_3, window_bounds = array<i64: 1, 128>}, {pipeline_mode = #tpu.pipeline_mode<synchronous>, transform_indices = @transform_4, window_bounds = array<i64: 128, 128>}, {pipeline_mode = #tpu.pipeline_mode<synchronous>, transform_indices = @transform_5, window_bounds = array<i64: 1, 128>}, {transform_indices = @transform_6, window_bounds = array<i64: 1, 8, 128>}]} {
    %c0 = arith.constant 0 : index
    %c0_0 = arith.constant 0 : index
    %c0_1 = arith.constant 0 : index
    %0 = vector.load %arg2[%c0, %c0_0, %c0_1] : memref<1x8x128xf32, #tpu.memory_space<vmem>>, vector<1x8x128xf32>
    %1 = vector.shape_cast %0 : vector<1x8x128xf32> to vector<8x128xf32>
    %c0_2 = arith.constant 0 : index
    %c0_3 = arith.constant 0 : index
    %c0_4 = arith.constant 0 : index
    %2 = vector.load %arg3[%c0_2, %c0_3, %c0_4] : memref<1x128x128xf32, #tpu.memory_space<vmem>>, vector<1x128x128xf32>
    %3 = vector.shape_cast %2 : vector<1x128x128xf32> to vector<128x128xf32>
    %cst = arith.constant dense<0.000000e+00> : vector<8x128xf32>
    %4 = tpu.matmul %1, %3, %cst {dimension_numbers = #tpu.dot_dimension_numbers<[1], [0], [0], [1], [0, 0, 1, 1], [], []>} : vector<8x128xf32>, vector<128x128xf32>, vector<8x128xf32> -> vector<8x128xf32>
    %c0_5 = arith.constant 0 : index
    %c0_6 = arith.constant 0 : index
    %5 = vector.load %arg4[%c0_5, %c0_6] : memref<128x128xf32, #tpu.memory_space<vmem>>, vector<128x128xf32>
    %cst_7 = arith.constant dense<0.000000e+00> : vector<8x128xf32>
    %6 = tpu.matmul %4, %5, %cst_7 {dimension_numbers = #tpu.dot_dimension_numbers<[1], [0], [0], [1], [0, 0, 1, 1], [], []>} : vector<8x128xf32>, vector<128x128xf32>, vector<8x128xf32> -> vector<8x128xf32>
    %c0_8 = arith.constant 0 : index
    %c0_9 = arith.constant 0 : index
    %7 = vector.load %arg5[%c0_8, %c0_9] : memref<1x128xf32, #tpu.memory_space<vmem>>, vector<1x128xf32>
    %8 = vector.broadcast %7 : vector<1x128xf32> to vector<8x128xf32>
    %9 = arith.addf %6, %8 : vector<8x128xf32>
    %cst_10 = arith.constant 0.000000e+00 : f32
    %10 = vector.broadcast %cst_10 : f32 to vector<8x128xf32>
    %11 = arith.maximumf %9, %10 : vector<8x128xf32>
    %c0_11 = arith.constant 0 : index
    %c0_12 = arith.constant 0 : index
    %12 = vector.load %arg6[%c0_11, %c0_12] : memref<128x128xf32, #tpu.memory_space<vmem>>, vector<128x128xf32>
    %cst_13 = arith.constant dense<0.000000e+00> : vector<8x128xf32>
    %13 = tpu.matmul %11, %12, %cst_13 {dimension_numbers = #tpu.dot_dimension_numbers<[1], [0], [0], [1], [0, 0, 1, 1], [], []>} : vector<8x128xf32>, vector<128x128xf32>, vector<8x128xf32> -> vector<8x128xf32>
    %c0_14 = arith.constant 0 : index
    %c0_15 = arith.constant 0 : index
    %14 = vector.load %arg7[%c0_14, %c0_15] : memref<1x128xf32, #tpu.memory_space<vmem>>, vector<1x128xf32>
    %15 = vector.broadcast %14 : vector<1x128xf32> to vector<8x128xf32>
    %16 = arith.addf %13, %15 : vector<8x128xf32>
    %c0_16 = arith.constant 0 : index
    %c0_17 = arith.constant 0 : index
    %c0_18 = arith.constant 0 : index
    %17 = vector.load %arg8[%c0_16, %c0_17, %c0_18] : memref<1x8x128xf32, #tpu.memory_space<vmem>>, vector<1x8x128xf32>
    %18 = vector.shape_cast %17 : vector<1x8x128xf32> to vector<8x128xf32>
    %19 = vector.shape_cast %16 : vector<8x128xf32> to vector<1x8x128xf32>
    tpu.vector_store %arg8[%c0_16, %c0_17, %c0_18], %19 {strides = array<i32>} : memref<1x8x128xf32, #tpu.memory_space<vmem>>, vector<1x8x128xf32>,
    return
  }
  func.func @transform_0(%arg0: i32, %arg1: i32) -> (i32, i32, i32) {
    %c0_i32 = arith.constant 0 : i32
    %c0_i32_0 = arith.constant 0 : i32
    return %arg0, %arg1, %c0_i32 : i32, i32, i32
  }
  func.func @transform_1(%arg0: i32, %arg1: i32) -> (i32, i32, i32) {
    %c0_i32 = arith.constant 0 : i32
    %c0_i32_0 = arith.constant 0 : i32
    %c0_i32_1 = arith.constant 0 : i32
    return %arg0, %c0_i32, %c0_i32_0 : i32, i32, i32
  }
  func.func @transform_2(%arg0: i32, %arg1: i32) -> (i32, i32) {
    %c0_i32 = arith.constant 0 : i32
    %c0_i32_0 = arith.constant 0 : i32
    %c0_i32_1 = arith.constant 0 : i32
    return %c0_i32, %c0_i32_0 : i32, i32
  }
  func.func @transform_3(%arg0: i32, %arg1: i32) -> (i32, i32) {
    %c0_i32 = arith.constant 0 : i32
    %c0_i32_0 = arith.constant 0 : i32
    %c0_i32_1 = arith.constant 0 : i32
    return %c0_i32, %c0_i32_0 : i32, i32
  }
  func.func @transform_4(%arg0: i32, %arg1: i32) -> (i32, i32) {
    %c0_i32 = arith.constant 0 : i32
    %c0_i32_0 = arith.constant 0 : i32
    %c0_i32_1 = arith.constant 0 : i32
    return %c0_i32, %c0_i32_0 : i32, i32
  }
  func.func @transform_5(%arg0: i32, %arg1: i32) -> (i32, i32) {
    %c0_i32 = arith.constant 0 : i32
    %c0_i32_0 = arith.constant 0 : i32
    %c0_i32_1 = arith.constant 0 : i32
    return %c0_i32, %c0_i32_0 : i32, i32
  }
  func.func @transform_6(%arg0: i32, %arg1: i32) -> (i32, i32, i32) {
    %c0_i32 = arith.constant 0 : i32
    %c0_i32_0 = arith.constant 0 : i32
    return %arg0, %arg1, %c0_i32 : i32, i32, i32
  }
}

</mosaic_0001>

<llo_original>
// kernel: tpu_custom_call.1
$region0: #{tpu_custom_call.1}
  #allocation0 [shape = 'u32[]', space=smem, size = 0x4, offset = 0x4, fixed_abs, tag = 'smem constant byte address 0x4 - core index']
  #allocation1 [shape = 'u32[144,128]{1,0:T(1,128)}', space=vmem, size = 0x12000, scoped, tag = 'internal scratch']
  %s0 = inlined_call_operand.hbm [shape: f32[1,8,128], index: 0, kind: input, shape index: {}]
  %s1 = inlined_call_operand.hbm [shape: f32[1,128,128], index: 1, kind: input, shape index: {}]
  %s2 = inlined_call_operand.hbm [shape: f32[128,128], index: 2, kind: input, shape index: {}]
  %s3 = inlined_call_operand.vmem [shape: f32[1,128], index: 3, kind: input, shape index: {}]
  %s4 = inlined_call_operand.hbm [shape: f32[128,128], index: 4, kind: input, shape index: {}]
  %s5 = inlined_call_operand.vmem [shape: f32[1,128], index: 5, kind: input, shape index: {}]
  %s6 = inlined_call_operand.hbm [shape: f32[1,8,128], index: 6, kind: output, shape index: {}]
  %s7 = sld [smem:[#allocation0]]
  $region50: #{tpu_custom_call.1} parent=0
    _
  %s9 = ssub.s32 1, %s7
  %s10 = scalar_select 0, %s9, %s7
  $region1: #{tpu_custom_call.1} parent=0
    #allocation2 [shape = 'u8[4096]{0}', space=vmem, size = 0x1000, scoped, tag = 'input window, operand 0, single buffered']
    #allocation3 [shape = 's32[1]{0}', space=sflag, size = 0x4, scoped, tag = 'scoped memory for tpu_custom_call.1']
    #allocation4 [shape = 's32[1]{0}', space=sflag, size = 0x4, scoped, tag = 'scoped memory for tpu_custom_call.1']
    #allocation5 [shape = 'u8[65536]{0}', space=vmem, size = 0x10000, scoped, tag = 'input window, operand 1, single buffered']
    #allocation6 [shape = 's32[1]{0}', space=sflag, size = 0x4, scoped, tag = 'scoped memory for tpu_custom_call.1']
    #allocation7 [shape = 'u8[65536]{0}', space=vmem, size = 0x10000, scoped, tag = 'input window, operand 2, single buffered']
    #allocation8 [shape = 'u8[65536]{0}', space=vmem, size = 0x10000, scoped, tag = 'input window, operand 4, single buffered']
    #allocation9 [shape = 's32[1]{0}', space=sflag, size = 0x4, scoped, tag = 'scoped memory for tpu_custom_call.1']
    #allocation10 [shape = 'u8[4096]{0}', space=vmem, size = 0x1000, scoped, tag = 'output window, operand 0, single buffered']
    %11 = vsyncpa [#allocation3], 0
    %12 = vsyncpa [#allocation6], 0
    %13 = vsyncpa [#allocation9], 0
    %14 = vsyncpa [#allocation4], 0
    // Predicated region
    $region2: #{tpu_custom_call.1} parent=1 // pred_check
      _
    $region3: #{tpu_custom_call.1} parent=1 // pred_check_branch
      %16 = sbr.rel (0) target = $region5
    $region4: #{tpu_custom_call.1} parent=1 // pred_region
      %s18 = ssub.s32 128, 128
      %19 = vsyncadd [#allocation3], %s18
      %s21 = sshll.u32 [#allocation2], 4
      %s22 = int_to_ptr.vmem [resolvable:$true] %s21
      %24 = dma.hbm_to_vmem [thread:$0]  %s0, 128, %s22, [#allocation3]
    $region5: #{tpu_custom_call.1} parent=1 // pred_fallthru
      _
    // Predicated region
    $region6: #{tpu_custom_call.1} parent=1 // pred_check
      _
    $region7: #{tpu_custom_call.1} parent=1 // pred_check_branch
      %26 = sbr.rel (0) target = $region9
    $region8: #{tpu_custom_call.1} parent=1 // pred_region
      %s28 = ssub.s32 2048, 2048
      %29 = vsyncadd [#allocation6], %s28
      %s30 = sshll.u32 [#allocation5], 4
      %s31 = int_to_ptr.vmem [resolvable:$true] %s30
      %36 = dma.hbm_to_vmem [thread:$0]  %s1, 2048, %s31, [#allocation6], 128, 128, 8
    $region9: #{tpu_custom_call.1} parent=1 // pred_fallthru
      _
    // Predicated region
    $region10: #{tpu_custom_call.1} parent=1 // pred_check
      _
    $region11: #{tpu_custom_call.1} parent=1 // pred_check_branch
      %38 = sbr.rel (0) target = $region13
    $region12: #{tpu_custom_call.1} parent=1 // pred_region
      %s40 = ssub.s32 2048, 2048
      %41 = vsyncadd [#allocation6], %s40
      %s42 = sshll.u32 [#allocation7], 4
      %s43 = int_to_ptr.vmem [resolvable:$true] %s42
      %48 = dma.hbm_to_vmem [thread:$0]  %s2, 2048, %s43, [#allocation6], 128, 128, 8
    $region13: #{tpu_custom_call.1} parent=1 // pred_fallthru
      _
    // Predicated region
    $region14: #{tpu_custom_call.1} parent=1 // pred_check
      _
    $region15: #{tpu_custom_call.1} parent=1 // pred_check_branch
      %50 = sbr.rel (0) target = $region17
    $region16: #{tpu_custom_call.1} parent=1 // pred_region
      _
    $region17: #{tpu_custom_call.1} parent=1 // pred_fallthru
      _
    // Predicated region
    $region18: #{tpu_custom_call.1} parent=1 // pred_check
      _
    $region19: #{tpu_custom_call.1} parent=1 // pred_check_branch
      %52 = sbr.rel (0) target = $region21
    $region20: #{tpu_custom_call.1} parent=1 // pred_region
      %s54 = ssub.s32 2048, 2048
      %55 = vsyncadd [#allocation9], %s54
      %s56 = sshll.u32 [#allocation8], 4
      %s57 = int_to_ptr.vmem [resolvable:$true] %s56
      %62 = dma.hbm_to_vmem [thread:$0]  %s4, 2048, %s57, [#allocation9], 128, 128, 8
    $region21: #{tpu_custom_call.1} parent=1 // pred_fallthru
      _
    // Predicated region
    $region22: #{tpu_custom_call.1} parent=1 // pred_check
      _
    $region23: #{tpu_custom_call.1} parent=1 // pred_check_branch
      %64 = sbr.rel (0) target = $region25
    $region24: #{tpu_custom_call.1} parent=1 // pred_region
      _
    $region25: #{tpu_custom_call.1} parent=1 // pred_fallthru
      _
    // Predicated region
    $region26: #{tpu_custom_call.1} parent=1 // pred_check
      _
    $region27: #{tpu_custom_call.1} parent=1 // pred_check_branch
      %66 = sbr.rel (0) target = $region29
    $region28: #{tpu_custom_call.1} parent=1 // pred_region
      %67 = dma.done [#allocation3], 128
    $region29: #{tpu_custom_call.1} parent=1 // pred_fallthru
      _
    // Predicated region
    $region30: #{tpu_custom_call.1} parent=1 // pred_check
      _
    $region31: #{tpu_custom_call.1} parent=1 // pred_check_branch
      %69 = sbr.rel (0) target = $region33
    $region32: #{tpu_custom_call.1} parent=1 // pred_region
      %70 = dma.done [#allocation6], 2048
    $region33: #{tpu_custom_call.1} parent=1 // pred_fallthru
      _
    // Predicated region
    $region34: #{tpu_custom_call.1} parent=1 // pred_check
      _
    $region35: #{tpu_custom_call.1} parent=1 // pred_check_branch
      %72 = sbr.rel (0) target = $region37
    $region36: #{tpu_custom_call.1} parent=1 // pred_region
      %73 = dma.done [#allocation6], 2048
    $region37: #{tpu_custom_call.1} parent=1 // pred_fallthru
      _
    // Predicated region
    $region38: #{tpu_custom_call.1} parent=1 // pred_check
      _
    $region39: #{tpu_custom_call.1} parent=1 // pred_check_branch
      %75 = sbr.rel (0) target = $region41
    $region40: #{tpu_custom_call.1} parent=1 // pred_region
      %76 = dma.done [#allocation9], 2048
    $region41: #{tpu_custom_call.1} parent=1 // pred_fallthru
      _
    %v77 = vld [vmem:[#allocation2] sm:$0xff]
    %v78 = vld [vmem:[#allocation5] sm:$0xff]
    %v79 = vld [vmem:[#allocation5 + $0x8] sm:$0xff]
    %v80 = vld [vmem:[#allocation5 + $0x10] sm:$0xff]
    %v81 = vld [vmem:[#allocation5 + $0x18] sm:$0xff]
    %v82 = vld [vmem:[#allocation5 + $0x20] sm:$0xff]
    %v83 = vld [vmem:[#allocation5 + $0x28] sm:$0xff]
    %v84 = vld [vmem:[#allocation5 + $0x30] sm:$0xff]
    %v85 = vld [vmem:[#allocation5 + $0x38] sm:$0xff]
    %v86 = vld [vmem:[#allocation5 + $0x40] sm:$0xff]
    %v87 = vld [vmem:[#allocation5 + $0x48] sm:$0xff]
    %v88 = vld [vmem:[#allocation5 + $0x50] sm:$0xff]
    %v89 = vld [vmem:[#allocation5 + $0x58] sm:$0xff]
    %v90 = vld [vmem:[#allocation5 + $0x60] sm:$0xff]
    %v91 = vld [vmem:[#allocation5 + $0x68] sm:$0xff]
    %v92 = vld [vmem:[#allocation5 + $0x70] sm:$0xff]
    %v93 = vld [vmem:[#allocation5 + $0x78] sm:$0xff]
    %94 = vmatprep.subr.mxu0 0.0
    %95 = vmatpush1.msra.mxu0 %v93
    %96 = vmatprep.subr.mxu0 0.0
    %97 = vmatpush1.msra.mxu0 %v92
    %98 = vmatprep.subr.mxu0 0.0
    %99 = vmatpush1.msra.mxu0 %v91
    %100 = vmatprep.subr.mxu0 0.0
    %101 = vmatpush1.msra.mxu0 %v90
    %102 = vmatprep.subr.mxu0 0.0
    %103 = vmatpush1.msra.mxu0 %v89
    %104 = vmatprep.subr.mxu0 0.0
    %105 = vmatpush1.msra.mxu0 %v88
    %106 = vmatprep.subr.mxu0 0.0
    %107 = vmatpush1.msra.mxu0 %v87
    %108 = vmatprep.subr.mxu0 0.0
    %109 = vmatpush1.msra.mxu0 %v86
    %110 = vmatprep.subr.mxu0 0.0
    %111 = vmatpush1.msra.mxu0 %v85
    %112 = vmatprep.subr.mxu0 0.0
    %113 = vmatpush1.msra.mxu0 %v84
    %114 = vmatprep.subr.mxu0 0.0
    %115 = vmatpush1.msra.mxu0 %v83
    %116 = vmatprep.subr.mxu0 0.0
    %117 = vmatpush1.msra.mxu0 %v82
    %118 = vmatprep.subr.mxu0 0.0
    %119 = vmatpush1.msra.mxu0 %v81
    %120 = vmatprep.subr.mxu0 0.0
    %121 = vmatpush1.msra.mxu0 %v80
    %122 = vmatprep.subr.mxu0 0.0
    %123 = vmatpush1.msra.mxu0 %v79
    %124 = vmatprep.subr.mxu0 0.0
    %125 = vmatpush1.msra.mxu0 %v78
    %126 = vmatprep.subr.mxu0 0.0
    %127 = vmatpush2.msra.mxu0 0.0
    %128 = vmatprep.subr.mxu0 0.0
    %129 = vmatpush2.msra.mxu0 0.0
    %130 = vmatprep.subr.mxu0 0.0
    %131 = vmatpush2.msra.mxu0 0.0
    %132 = vmatprep.subr.mxu0 0.0
    %133 = vmatpush2.msra.mxu0 0.0
    %134 = vmatprep.subr.mxu0 0.0
    %135 = vmatpush2.msra.mxu0 0.0
    %136 = vmatprep.subr.mxu0 0.0
    %137 = vmatpush2.msra.mxu0 0.0
    %138 = vmatprep.subr.mxu0 0.0
    %139 = vmatpush2.msra.mxu0 0.0
    %140 = vmatprep.subr.mxu0 0.0
    %141 = vmatpush2.msra.mxu0 0.0
    %142 = vmatprep.subr.mxu0 0.0
    %143 = vmatpush2.msra.mxu0 0.0
    %144 = vmatprep.subr.mxu0 0.0
    %145 = vmatpush2.msra.mxu0 0.0
    %146 = vmatprep.subr.mxu0 0.0
    %147 = vmatpush2.msra.mxu0 0.0
    %148 = vmatprep.subr.mxu0 0.0
    %149 = vmatpush2.msra.mxu0 0.0
    %150 = vmatprep.subr.mxu0 0.0
    %151 = vmatpush2.msra.mxu0 0.0
    %152 = vmatprep.subr.mxu0 0.0
    %153 = vmatpush2.msra.mxu0 0.0
    %154 = vmatprep.subr.mxu0 0.0
    %155 = vmatpush2.msra.mxu0 0.0
    %156 = vmatprep.subr.mxu0 0.0
    %157 = vmatpush2.msra.mxu0 0.0
    %158 = vmatprep.mubr.f32.mxu0 0.0
    %159 = vmatmul.mubr.f32.gmra.mxu0 %v77
    %v160 = vpop.f32.mrf.mxu0
    %v161 = vadd.f32 0.0, %v160
    %v162 = vpop.f32.mrf.mxu0
    %163 = vdwg.mxu0
    %v164 = vld [vmem:[#allocation7] sm:$0xff]
    %v165 = vld [vmem:[#allocation7 + $0x8] sm:$0xff]
    %v166 = vld [vmem:[#allocation7 + $0x10] sm:$0xff]
    %v167 = vld [vmem:[#allocation7 + $0x18] sm:$0xff]
    %v168 = vld [vmem:[#allocation7 + $0x20] sm:$0xff]
    %v169 = vld [vmem:[#allocation7 + $0x28] sm:$0xff]
    %v170 = vld [vmem:[#allocation7 + $0x30] sm:$0xff]
    %v171 = vld [vmem:[#allocation7 + $0x38] sm:$0xff]
    %v172 = vld [vmem:[#allocation7 + $0x40] sm:$0xff]
    %v173 = vld [vmem:[#allocation7 + $0x48] sm:$0xff]
    %v174 = vld [vmem:[#allocation7 + $0x50] sm:$0xff]
    %v175 = vld [vmem:[#allocation7 + $0x58] sm:$0xff]
    %v176 = vld [vmem:[#allocation7 + $0x60] sm:$0xff]
    %v177 = vld [vmem:[#allocation7 + $0x68] sm:$0xff]
    %v178 = vld [vmem:[#allocation7 + $0x70] sm:$0xff]
    %v179 = vld [vmem:[#allocation7 + $0x78] sm:$0xff]
    %v180 = vld [vmem:[%s3] sm:$0x1]
    %v182 = vlaneseq
    %v183 = vshrl.u32 %v182, 7
    %v184 = vsub.s32 0, %v183
    %v185 = vrot.slane %v180, %v184
    %187 = vmatprep.subr.mxu0 0.0
    %188 = vmatpush1.msra.mxu0 %v179
    %189 = vmatprep.subr.mxu0 0.0
    %190 = vmatpush1.msra.mxu0 %v178
    %191 = vmatprep.subr.mxu0 0.0
    %192 = vmatpush1.msra.mxu0 %v177
    %193 = vmatprep.subr.mxu0 0.0
    %194 = vmatpush1.msra.mxu0 %v176
    %195 = vmatprep.subr.mxu0 0.0
    %196 = vmatpush1.msra.mxu0 %v175
    %197 = vmatprep.subr.mxu0 0.0
    %198 = vmatpush1.msra.mxu0 %v174
    %199 = vmatprep.subr.mxu0 0.0
    %200 = vmatpush1.msra.mxu0 %v173
    %201 = vmatprep.subr.mxu0 0.0
    %202 = vmatpush1.msra.mxu0 %v172
    %203 = vmatprep.subr.mxu0 0.0
    %204 = vmatpush1.msra.mxu0 %v171
    %205 = vmatprep.subr.mxu0 0.0
    %206 = vmatpush1.msra.mxu0 %v170
    %207 = vmatprep.subr.mxu0 0.0
    %208 = vmatpush1.msra.mxu0 %v169
    %209 = vmatprep.subr.mxu0 0.0
    %210 = vmatpush1.msra.mxu0 %v168
    %211 = vmatprep.subr.mxu0 0.0
    %212 = vmatpush1.msra.mxu0 %v167
    %213 = vmatprep.subr.mxu0 0.0
    %214 = vmatpush1.msra.mxu0 %v166
    %215 = vmatprep.subr.mxu0 0.0
    %216 = vmatpush1.msra.mxu0 %v165
    %217 = vmatprep.subr.mxu0 0.0
    %218 = vmatpush1.msra.mxu0 %v164
    %219 = vmatprep.subr.mxu0 0.0
    %220 = vmatpush2.msra.mxu0 0.0
    %221 = vmatprep.subr.mxu0 0.0
    %222 = vmatpush2.msra.mxu0 0.0
    %223 = vmatprep.subr.mxu0 0.0
    %224 = vmatpush2.msra.mxu0 0.0
    %225 = vmatprep.subr.mxu0 0.0
    %226 = vmatpush2.msra.mxu0 0.0
    %227 = vmatprep.subr.mxu0 0.0
    %228 = vmatpush2.msra.mxu0 0.0
    %229 = vmatprep.subr.mxu0 0.0
    %230 = vmatpush2.msra.mxu0 0.0
    %231 = vmatprep.subr.mxu0 0.0
    %232 = vmatpush2.msra.mxu0 0.0
    %233 = vmatprep.subr.mxu0 0.0
    %234 = vmatpush2.msra.mxu0 0.0
    %235 = vmatprep.subr.mxu0 0.0
    %236 = vmatpush2.msra.mxu0 0.0
    %237 = vmatprep.subr.mxu0 0.0
    %238 = vmatpush2.msra.mxu0 0.0
    %239 = vmatprep.subr.mxu0 0.0
    %240 = vmatpush2.msra.mxu0 0.0
    %241 = vmatprep.subr.mxu0 0.0
    %242 = vmatpush2.msra.mxu0 0.0
    %243 = vmatprep.subr.mxu0 0.0
    %244 = vmatpush2.msra.mxu0 0.0
    %245 = vmatprep.subr.mxu0 0.0
    %246 = vmatpush2.msra.mxu0 0.0
    %247 = vmatprep.subr.mxu0 0.0
    %248 = vmatpush2.msra.mxu0 0.0
    %249 = vmatprep.subr.mxu0 0.0
    %250 = vmatpush2.msra.mxu0 0.0
    %251 = vmatprep.mubr.f32.mxu0 0.0
    %252 = vmatmul.mubr.f32.gmra.mxu0 %v161
    %v253 = vpop.f32.mrf.mxu0
    %v254 = vadd.f32 %v185, %v253
    %v255 = vpop.f32.mrf.mxu0
    %256 = vdwg.mxu0
    %v257 = vmax.f32 %v254, 0.0
    %v258 = vld [vmem:[#allocation8] sm:$0xff]
    %v259 = vld [vmem:[#allocation8 + $0x8] sm:$0xff]
    %v260 = vld [vmem:[#allocation8 + $0x10] sm:$0xff]
    %v261 = vld [vmem:[#allocation8 + $0x18] sm:$0xff]
    %v262 = vld [vmem:[#allocation8 + $0x20] sm:$0xff]
    %v263 = vld [vmem:[#allocation8 + $0x28] sm:$0xff]
    %v264 = vld [vmem:[#allocation8 + $0x30] sm:$0xff]
    %v265 = vld [vmem:[#allocation8 + $0x38] sm:$0xff]
    %v266 = vld [vmem:[#allocation8 + $0x40] sm:$0xff]
    %v267 = vld [vmem:[#allocation8 + $0x48] sm:$0xff]
    %v268 = vld [vmem:[#allocation8 + $0x50] sm:$0xff]
    %v269 = vld [vmem:[#allocation8 + $0x58] sm:$0xff]
    %v270 = vld [vmem:[#allocation8 + $0x60] sm:$0xff]
    %v271 = vld [vmem:[#allocation8 + $0x68] sm:$0xff]
    %v272 = vld [vmem:[#allocation8 + $0x70] sm:$0xff]
    %v273 = vld [vmem:[#allocation8 + $0x78] sm:$0xff]
    %v274 = vld [vmem:[%s5] sm:$0x1]
    %v276 = vlaneseq
    %v277 = vshrl.u32 %v276, 7
    %v278 = vsub.s32 0, %v277
    %v279 = vrot.slane %v274, %v278
    %281 = vmatprep.subr.mxu0 0.0
    %282 = vmatpush1.msra.mxu0 %v273
    %283 = vmatprep.subr.mxu0 0.0
    %284 = vmatpush1.msra.mxu0 %v272
    %285 = vmatprep.subr.mxu0 0.0
    %286 = vmatpush1.msra.mxu0 %v271
    %287 = vmatprep.subr.mxu0 0.0
    %288 = vmatpush1.msra.mxu0 %v270
    %289 = vmatprep.subr.mxu0 0.0
    %290 = vmatpush1.msra.mxu0 %v269
    %291 = vmatprep.subr.mxu0 0.0
    %292 = vmatpush1.msra.mxu0 %v268
    %293 = vmatprep.subr.mxu0 0.0
    %294 = vmatpush1.msra.mxu0 %v267
    %295 = vmatprep.subr.mxu0 0.0
    %296 = vmatpush1.msra.mxu0 %v266
    %297 = vmatprep.subr.mxu0 0.0
    %298 = vmatpush1.msra.mxu0 %v265
    %299 = vmatprep.subr.mxu0 0.0
    %300 = vmatpush1.msra.mxu0 %v264
    %301 = vmatprep.subr.mxu0 0.0
    %302 = vmatpush1.msra.mxu0 %v263
    %303 = vmatprep.subr.mxu0 0.0
    %304 = vmatpush1.msra.mxu0 %v262
    %305 = vmatprep.subr.mxu0 0.0
    %306 = vmatpush1.msra.mxu0 %v261
    %307 = vmatprep.subr.mxu0 0.0
    %308 = vmatpush1.msra.mxu0 %v260
    %309 = vmatprep.subr.mxu0 0.0
    %310 = vmatpush1.msra.mxu0 %v259
    %311 = vmatprep.subr.mxu0 0.0
    %312 = vmatpush1.msra.mxu0 %v258
    %313 = vmatprep.subr.mxu0 0.0
    %314 = vmatpush2.msra.mxu0 0.0
    %315 = vmatprep.subr.mxu0 0.0
    %316 = vmatpush2.msra.mxu0 0.0
    %317 = vmatprep.subr.mxu0 0.0
    %318 = vmatpush2.msra.mxu0 0.0
    %319 = vmatprep.subr.mxu0 0.0
    %320 = vmatpush2.msra.mxu0 0.0
    %321 = vmatprep.subr.mxu0 0.0
    %322 = vmatpush2.msra.mxu0 0.0
    %323 = vmatprep.subr.mxu0 0.0
    %324 = vmatpush2.msra.mxu0 0.0
    %325 = vmatprep.subr.mxu0 0.0
    %326 = vmatpush2.msra.mxu0 0.0
    %327 = vmatprep.subr.mxu0 0.0
    %328 = vmatpush2.msra.mxu0 0.0
    %329 = vmatprep.subr.mxu0 0.0
    %330 = vmatpush2.msra.mxu0 0.0
    %331 = vmatprep.subr.mxu0 0.0
    %332 = vmatpush2.msra.mxu0 0.0
    %333 = vmatprep.subr.mxu0 0.0
    %334 = vmatpush2.msra.mxu0 0.0
    %335 = vmatprep.subr.mxu0 0.0
    %336 = vmatpush2.msra.mxu0 0.0
    %337 = vmatprep.subr.mxu0 0.0
    %338 = vmatpush2.msra.mxu0 0.0
    %339 = vmatprep.subr.mxu0 0.0
    %340 = vmatpush2.msra.mxu0 0.0
    %341 = vmatprep.subr.mxu0 0.0
    %342 = vmatpush2.msra.mxu0 0.0
    %343 = vmatprep.subr.mxu0 0.0
    %344 = vmatpush2.msra.mxu0 0.0
    %345 = vmatprep.mubr.f32.mxu0 0.0
    %346 = vmatmul.mubr.f32.gmra.mxu0 %v257
    %v347 = vpop.f32.mrf.mxu0
    %v348 = vadd.f32 %v279, %v347
    %v349 = vpop.f32.mrf.mxu0
    %350 = vdwg.mxu0
    %351 = vst [vmem:[#allocation10] sm:$0xff] %v348
    // Predicated region
    $region42: #{tpu_custom_call.1} parent=1 // pred_check
      _
    $region43: #{tpu_custom_call.1} parent=1 // pred_check_branch
      %353 = sbr.rel (0) target = $region45
    $region44: #{tpu_custom_call.1} parent=1 // pred_region
      %s355 = ssub.s32 128, 128
      %356 = vsyncadd [#allocation4], %s355
      %s358 = sshll.u32 [#allocation10], 4
      %s359 = int_to_ptr.vmem [resolvable:$true] %s358
      %361 = dma.vmem_to_hbm [thread:$0]  %s359, 128, %s6, [#allocation4]
    $region45: #{tpu_custom_call.1} parent=1 // pred_fallthru
      _
    // Predicated region
    $region46: #{tpu_custom_call.1} parent=1 // pred_check
      _
    $region47: #{tpu_custom_call.1} parent=1 // pred_check_branch
      %363 = sbr.rel (0) target = $region49
    $region48: #{tpu_custom_call.1} parent=1 // pred_region
      %364 = dma.done [#allocation4], 128
    $region49: #{tpu_custom_call.1} parent=1 // pred_fallthru
      _
    %365 = vsyncpa [#allocation3], 1
    %366 = vsyncpa [#allocation6], 1
    %367 = vsyncpa [#allocation9], 1
    %368 = vsyncpa [#allocation4], 1

</llo_original>
